<compile_context>
chip_gen: v5e
topology: v5e:2x2
jax: 0.10.0
libtpu: 0.0.40
codegen_flags: <defaults>
</compile_context>

<pallas_src>
import jax
import jax.numpy as jnp
from jax.experimental import pallas as pl
from jax.experimental.pallas import tpu as pltpu

F_IN = 30   # original input features
F_PAD = 32  # padded to a sublane multiple (8) for f32/bf16 layouts
H1 = 64
H2 = 32
F_OUT = 1


def mlp_kernel(x_ref, w1_ref, b1_ref, w2_ref, b2_ref, w3_ref, b3_ref, o_ref):
    """Fused feature-major MLP forward for one batch tile.

    x_ref : (F_PAD, TILE_B)  compute dtype (bf16 by default)
    w*_ref: (out, in)        compute dtype, VMEM-resident across grid steps
    b*_ref: (out, 1)         f32
    o_ref : (1, TILE_B)      f32
    """
    x = x_ref[...]

    # fc1 + ReLU   (MXU matmul, f32 accumulation; epilogue in f32)
    h1 = jnp.dot(w1_ref[...], x, preferred_element_type=jnp.float32)
    h1 = jnp.maximum(h1 + b1_ref[...], 0.0)                    # (H1, TILE_B) f32

    # fc2 + ReLU
    h2 = jnp.dot(w2_ref[...], h1.astype(w2_ref.dtype),
                 preferred_element_type=jnp.float32)
    h2 = jnp.maximum(h2 + b2_ref[...], 0.0)                    # (H2, TILE_B) f32

    # fc3 + Sigmoid: exp -> EUP, approx reciprocal -> EUP (no long VPU divide)
    z = jnp.dot(w3_ref[...], h2.astype(w3_ref.dtype),
                preferred_element_type=jnp.float32)
    z = z + b3_ref[...]                                        # (1, TILE_B) f32
    o_ref[...] = pl.reciprocal(1.0 + jnp.exp(-z), approx=True)


def net_forward(x, params, *, compute_dtype=jnp.bfloat16, max_tile_b=1024):
    """x: (B, 30) f32 -> (B, 1) f32."""
    w1, b1, w2, b2, w3, b3 = params  # torch layout: w (out, in), b (out,)
    B = x.shape[0]

    # Lane-dense batch tiling: TILE_B multiple of 128, capped at max_tile_b.
    tile_b = min(max_tile_b, max(128, pl.cdiv(B, 128) * 128))
    b_pad = pl.cdiv(B, tile_b) * tile_b
    num_tiles = b_pad // tile_b

    # Feature-major activations, K padded 30 -> 32, batch padded to tile multiple.
    x_fm = jnp.zeros((F_PAD, b_pad), compute_dtype)
    x_fm = x_fm.at[:F_IN, :B].set(x.T.astype(compute_dtype))

    w1p = jnp.zeros((H1, F_PAD), compute_dtype).at[:, :F_IN].set(
        w1.astype(compute_dtype))
    w2p = w2.astype(compute_dtype)
    w3p = w3.astype(compute_dtype)
    b1c = b1.reshape(H1, 1).astype(jnp.float32)
    b2c = b2.reshape(H2, 1).astype(jnp.float32)
    b3c = b3.reshape(F_OUT, 1).astype(jnp.float32)

    # Weights/biases: constant block index -> stay resident in VMEM.
    resident = lambda shape: pl.BlockSpec(shape, lambda i: (0, 0))

    itemsize = jnp.dtype(compute_dtype).itemsize
    cost = pl.CostEstimate(
        flops=2 * b_pad * (F_PAD * H1 + H1 * H2 + H2 * F_OUT),
        transcendentals=2 * b_pad,
        bytes_accessed=(x_fm.size * itemsize                 # x in
                        + b_pad * F_OUT * 4                  # out
                        + (w1p.size + w2p.size + w3p.size) * itemsize
                        + (H1 + H2 + F_OUT) * 4),            # biases
    )

    out_fm = pl.pallas_call(
        mlp_kernel,
        out_shape=jax.ShapeDtypeStruct((F_OUT, b_pad), jnp.float32),
        grid=(num_tiles,),
        in_specs=[
            pl.BlockSpec((F_PAD, tile_b), lambda i: (0, i)),   # x tile
            resident((H1, F_PAD)), resident((H1, 1)),          # fc1
            resident((H2, H1)),    resident((H2, 1)),          # fc2
            resident((F_OUT, H2)), resident((F_OUT, 1)),       # fc3
        ],
        out_specs=pl.BlockSpec((F_OUT, tile_b), lambda i: (0, i)),
        compiler_params=pltpu.CompilerParams(
            dimension_semantics=("parallel",)),                # megacore on v7x
        cost_estimate=cost,
    )(x_fm, w1p, b1c, w2p, b2c, w3p, b3c)

    return out_fm[:, :B].T  # (B, 1) f32


def init_params(key):
    """PyTorch-default Linear init: uniform(-1/sqrt(fan_in), 1/sqrt(fan_in)),
    weights stored (out_features, in_features) like nn.Linear."""
    def linear(key, fan_in, fan_out):
        kw, kb = jax.random.split(key)
        bound = 1.0 / jnp.sqrt(fan_in)
        w = jax.random.uniform(kw, (fan_out, fan_in), jnp.float32, -bound, bound)
        b = jax.random.uniform(kb, (fan_out,), jnp.float32, -bound, bound)
        return w, b

    k1, k2, k3 = jax.random.split(key, 3)
    w1, b1 = linear(k1, F_IN, H1)
    w2, b2 = linear(k2, H1, H2)
    w3, b3 = linear(k3, H2, F_OUT)
    return (w1, b1, w2, b2, w3, b3)


def reference_forward(x, params):
    """Pure-JAX f32 reference of the same forward pass."""
    w1, b1, w2, b2, w3, b3 = params
    h1 = jnp.maximum(x @ w1.T + b1, 0.0)
    h2 = jnp.maximum(h1 @ w2.T + b2, 0.0)
    return jax.nn.sigmoid(h2 @ w3.T + b3).reshape(-1, 1)


if __name__ == "__main__":
    key = jax.random.PRNGKey(0)
    kx, kp = jax.random.split(key)

    batch = 8
    x = jax.random.normal(kx, (batch, F_IN), dtype=jnp.float32)
    params = init_params(kp)
    ref = reference_forward(x, params)

    # f32 compute path: tight check (only approx-reciprocal epsilon).
    out_f32 = jax.block_until_ready(
        net_forward(x, params, compute_dtype=jnp.float32))
    assert out_f32.shape == (batch, 1)
    assert jnp.allclose(out_f32, ref, atol=5e-3, rtol=5e-3)

    # Default bf16 compute path (f32 accumulation): looser check.
    out_bf16 = jax.block_until_ready(net_forward(x, params))
    assert out_bf16.shape == (batch, 1)
    assert jnp.allclose(out_bf16, ref, atol=2e-2, rtol=2e-2)

    print("KERNEL_OK")
</pallas_src>

<mosaic_0001>
module attributes {stable_mosaic.version = 11 : i64} {
  func.func @mlp_kernel(%arg0: i32, %arg1: memref<32x128xf32, #tpu.memory_space<vmem>>, %arg2: memref<64x32xf32, #tpu.memory_space<vmem>>, %arg3: memref<64x1xf32, #tpu.memory_space<vmem>>, %arg4: memref<32x64xf32, #tpu.memory_space<vmem>>, %arg5: memref<32x1xf32, #tpu.memory_space<vmem>>, %arg6: memref<1x32xf32, #tpu.memory_space<vmem>>, %arg7: memref<1x1xf32, #tpu.memory_space<vmem>>, %arg8: memref<1x128xf32, #tpu.memory_space<vmem>>) attributes {dimension_semantics = [#tpu.dimension_semantics<parallel>], iteration_bounds = array<i64: 1>, scalar_prefetch = 0 : i64, scratch_operands = 0 : i64, tpu.core_type = #tpu.core_type<tc>, window_params = [{transform_indices = @transform_0, window_bounds = array<i64: 32, 128>}, {pipeline_mode = #tpu.pipeline_mode<synchronous>, transform_indices = @transform_1, window_bounds = array<i64: 64, 32>}, {pipeline_mode = #tpu.pipeline_mode<synchronous>, transform_indices = @transform_2, window_bounds = array<i64: 64, 1>}, {pipeline_mode = #tpu.pipeline_mode<synchronous>, transform_indices = @transform_3, window_bounds = array<i64: 32, 64>}, {pipeline_mode = #tpu.pipeline_mode<synchronous>, transform_indices = @transform_4, window_bounds = array<i64: 32, 1>}, {pipeline_mode = #tpu.pipeline_mode<synchronous>, transform_indices = @transform_5, window_bounds = array<i64: 1, 32>}, {pipeline_mode = #tpu.pipeline_mode<synchronous>, transform_indices = @transform_6, window_bounds = array<i64: 1, 1>}, {transform_indices = @transform_7, window_bounds = array<i64: 1, 128>}]} {
    %c0 = arith.constant 0 : index
    %c0_0 = arith.constant 0 : index
    %0 = vector.load %arg1[%c0, %c0_0] : memref<32x128xf32, #tpu.memory_space<vmem>>, vector<32x128xf32>
    %c0_1 = arith.constant 0 : index
    %c0_2 = arith.constant 0 : index
    %1 = vector.load %arg2[%c0_1, %c0_2] : memref<64x32xf32, #tpu.memory_space<vmem>>, vector<64x32xf32>
    %cst = arith.constant dense<0.000000e+00> : vector<64x128xf32>
    %2 = tpu.matmul %1, %0, %cst {dimension_numbers = #tpu.dot_dimension_numbers<[1], [0], [0], [1], [0, 0, 1, 1], [], []>} : vector<64x32xf32>, vector<32x128xf32>, vector<64x128xf32> -> vector<64x128xf32>
    %c0_3 = arith.constant 0 : index
    %c0_4 = arith.constant 0 : index
    %3 = vector.load %arg3[%c0_3, %c0_4] : memref<64x1xf32, #tpu.memory_space<vmem>>, vector<64x1xf32>
    %4 = vector.broadcast %3 : vector<64x1xf32> to vector<64x128xf32>
    %5 = arith.addf %2, %4 : vector<64x128xf32>
    %cst_5 = arith.constant 0.000000e+00 : f32
    %6 = vector.broadcast %cst_5 : f32 to vector<64x128xf32>
    %7 = arith.maximumf %5, %6 : vector<64x128xf32>
    %c0_6 = arith.constant 0 : index
    %c0_7 = arith.constant 0 : index
    %8 = vector.load %arg4[%c0_6, %c0_7] : memref<32x64xf32, #tpu.memory_space<vmem>>, vector<32x64xf32>
    %cst_8 = arith.constant dense<0.000000e+00> : vector<32x128xf32>
    %9 = tpu.matmul %8, %7, %cst_8 {dimension_numbers = #tpu.dot_dimension_numbers<[1], [0], [0], [1], [0, 0, 1, 1], [], []>} : vector<32x64xf32>, vector<64x128xf32>, vector<32x128xf32> -> vector<32x128xf32>
    %c0_9 = arith.constant 0 : index
    %c0_10 = arith.constant 0 : index
    %10 = vector.load %arg5[%c0_9, %c0_10] : memref<32x1xf32, #tpu.memory_space<vmem>>, vector<32x1xf32>
    %11 = vector.broadcast %10 : vector<32x1xf32> to vector<32x128xf32>
    %12 = arith.addf %9, %11 : vector<32x128xf32>
    %cst_11 = arith.constant 0.000000e+00 : f32
    %13 = vector.broadcast %cst_11 : f32 to vector<32x128xf32>
    %14 = arith.maximumf %12, %13 : vector<32x128xf32>
    %c0_12 = arith.constant 0 : index
    %c0_13 = arith.constant 0 : index
    %15 = vector.load %arg6[%c0_12, %c0_13] : memref<1x32xf32, #tpu.memory_space<vmem>>, vector<1x32xf32>
    %cst_14 = arith.constant dense<0.000000e+00> : vector<1x128xf32>
    %16 = tpu.matmul %15, %14, %cst_14 {dimension_numbers = #tpu.dot_dimension_numbers<[1], [0], [0], [1], [0, 0, 1, 1], [], []>} : vector<1x32xf32>, vector<32x128xf32>, vector<1x128xf32> -> vector<1x128xf32>
    %c0_15 = arith.constant 0 : index
    %c0_16 = arith.constant 0 : index
    %17 = vector.load %arg7[%c0_15, %c0_16] : memref<1x1xf32, #tpu.memory_space<vmem>>, vector<1x1xf32>
    %18 = vector.broadcast %17 : vector<1x1xf32> to vector<1x128xf32>
    %19 = arith.addf %16, %18 : vector<1x128xf32>
    %cst_17 = arith.constant 0.000000e+00 : f32
    %20 = vector.broadcast %cst_17 : f32 to vector<1x128xf32>
    %21 = arith.subf %20, %19 : vector<1x128xf32>
    %22 = math.exp %21 : vector<1x128xf32>
    %cst_18 = arith.constant 1.000000e+00 : f32
    %23 = vector.broadcast %cst_18 : f32 to vector<1x128xf32>
    %24 = arith.addf %23, %22 : vector<1x128xf32>
    %25 = tpu.reciprocal %24 {approx = true} : vector<1x128xf32> -> vector<1x128xf32>
    %c0_19 = arith.constant 0 : index
    %c0_20 = arith.constant 0 : index
    %26 = vector.load %arg8[%c0_19, %c0_20] : memref<1x128xf32, #tpu.memory_space<vmem>>, vector<1x128xf32>
    tpu.vector_store %arg8[%c0_19, %c0_20], %25 {strides = array<i32>} : memref<1x128xf32, #tpu.memory_space<vmem>>, vector<1x128xf32>,
    return
  }
  func.func @transform_0(%arg0: i32) -> (i32, i32) {
    %c0_i32 = arith.constant 0 : i32
    %c0_i32_0 = arith.constant 0 : i32
    return %c0_i32, %arg0 : i32, i32
  }
  func.func @transform_1(%arg0: i32) -> (i32, i32) {
    %c0_i32 = arith.constant 0 : i32
    %c0_i32_0 = arith.constant 0 : i32
    %c0_i32_1 = arith.constant 0 : i32
    return %c0_i32, %c0_i32_0 : i32, i32
  }
  func.func @transform_2(%arg0: i32) -> (i32, i32) {
    %c0_i32 = arith.constant 0 : i32
    %c0_i32_0 = arith.constant 0 : i32
    %c0_i32_1 = arith.constant 0 : i32
    return %c0_i32, %c0_i32_0 : i32, i32
  }
  func.func @transform_3(%arg0: i32) -> (i32, i32) {
    %c0_i32 = arith.constant 0 : i32
    %c0_i32_0 = arith.constant 0 : i32
    %c0_i32_1 = arith.constant 0 : i32
    return %c0_i32, %c0_i32_0 : i32, i32
  }
  func.func @transform_4(%arg0: i32) -> (i32, i32) {
    %c0_i32 = arith.constant 0 : i32
    %c0_i32_0 = arith.constant 0 : i32
    %c0_i32_1 = arith.constant 0 : i32
    return %c0_i32, %c0_i32_0 : i32, i32
  }
  func.func @transform_5(%arg0: i32) -> (i32, i32) {
    %c0_i32 = arith.constant 0 : i32
    %c0_i32_0 = arith.constant 0 : i32
    %c0_i32_1 = arith.constant 0 : i32
    return %c0_i32, %c0_i32_0 : i32, i32
  }
  func.func @transform_6(%arg0: i32) -> (i32, i32) {
    %c0_i32 = arith.constant 0 : i32
    %c0_i32_0 = arith.constant 0 : i32
    %c0_i32_1 = arith.constant 0 : i32
    return %c0_i32, %c0_i32_0 : i32, i32
  }
  func.func @transform_7(%arg0: i32) -> (i32, i32) {
    %c0_i32 = arith.constant 0 : i32
    %c0_i32_0 = arith.constant 0 : i32
    return %c0_i32, %arg0 : i32, i32
  }
}

</mosaic_0001>

<llo_original>
// kernel: tpu_custom_call.1
$region0: #{tpu_custom_call.1}
  #allocation0 [shape = 'u32[]', space=smem, size = 0x4, offset = 0x4, fixed_abs, tag = 'smem constant byte address 0x4 - core index']
  #allocation1 [shape = 'u32[72,128]{1,0:T(1,128)}', space=vmem, size = 0x9000, scoped, tag = 'internal scratch']
  #allocation2 [shape = 'f32[1,1]{1,0:T(1,128)S(1)}', space=vmem, size = 0x200, scoped, tag = 'scoped memory for tpu_custom_call.1']
  %s0 = inlined_call_operand.vmem [shape: f32[32,128], index: 0, kind: input, shape index: {}]
  %s1 = inlined_call_operand.vmem [shape: f32[64,32], index: 1, kind: input, shape index: {}]
  %s2 = inlined_call_operand.vmem [shape: f32[64,1], index: 2, kind: input, shape index: {}]
  %s3 = inlined_call_operand.vmem [shape: f32[32,64], index: 3, kind: input, shape index: {}]
  %s4 = inlined_call_operand.vmem [shape: f32[32,1], index: 4, kind: input, shape index: {}]
  %s5 = inlined_call_operand.vmem [shape: f32[1,32], index: 5, kind: input, shape index: {}]
  %s6 = inlined_call_operand.<no memory space> [shape: f32[1,1], index: 6, kind: input, shape index: {}]
  %s7 = inlined_call_operand.hbm [shape: f32[1,128], index: 7, kind: output, shape index: {}]
  %s8 = sld [smem:[#allocation0]]
  $region38: #{tpu_custom_call.1} parent=0
    _
  %s10 = ssub.s32 1, %s8
  %s11 = scalar_select 0, %s10, %s8
  %v12 = vstv %s6
  %13 = vst [vmem:[#allocation2] sm:$0x1] %v12
  $region1: #{tpu_custom_call.1} parent=0
    #allocation3 [shape = 'u8[512]{0}', space=vmem, size = 0x400, scoped, tag = 'output window, operand 0, single buffered']
    #allocation4 [shape = 's32[1]{0}', space=sflag, size = 0x4, scoped, tag = 'scoped memory for tpu_custom_call.1']
    %14 = vsyncpa [#allocation4], 0
    // Predicated region
    $region2: #{tpu_custom_call.1} parent=1 // pred_check
      _
    $region3: #{tpu_custom_call.1} parent=1 // pred_check_branch
      %16 = sbr.rel (0) target = $region5
    $region4: #{tpu_custom_call.1} parent=1 // pred_region
      _
    $region5: #{tpu_custom_call.1} parent=1 // pred_fallthru
      _
    // Predicated region
    $region6: #{tpu_custom_call.1} parent=1 // pred_check
      _
    $region7: #{tpu_custom_call.1} parent=1 // pred_check_branch
      %18 = sbr.rel (0) target = $region9
    $region8: #{tpu_custom_call.1} parent=1 // pred_region
      _
    $region9: #{tpu_custom_call.1} parent=1 // pred_fallthru
      _
    // Predicated region
    $region10: #{tpu_custom_call.1} parent=1 // pred_check
      _
    $region11: #{tpu_custom_call.1} parent=1 // pred_check_branch
      %20 = sbr.rel (0) target = $region13
    $region12: #{tpu_custom_call.1} parent=1 // pred_region
      _
    $region13: #{tpu_custom_call.1} parent=1 // pred_fallthru
      _
    // Predicated region
    $region14: #{tpu_custom_call.1} parent=1 // pred_check
      _
    $region15: #{tpu_custom_call.1} parent=1 // pred_check_branch
      %22 = sbr.rel (0) target = $region17
    $region16: #{tpu_custom_call.1} parent=1 // pred_region
      _
    $region17: #{tpu_custom_call.1} parent=1 // pred_fallthru
      _
    // Predicated region
    $region18: #{tpu_custom_call.1} parent=1 // pred_check
      _
    $region19: #{tpu_custom_call.1} parent=1 // pred_check_branch
      %24 = sbr.rel (0) target = $region21
    $region20: #{tpu_custom_call.1} parent=1 // pred_region
      _
    $region21: #{tpu_custom_call.1} parent=1 // pred_fallthru
      _
    // Predicated region
    $region22: #{tpu_custom_call.1} parent=1 // pred_check
      _
    $region23: #{tpu_custom_call.1} parent=1 // pred_check_branch
      %26 = sbr.rel (0) target = $region25
    $region24: #{tpu_custom_call.1} parent=1 // pred_region
      _
    $region25: #{tpu_custom_call.1} parent=1 // pred_fallthru
      _
    // Predicated region
    $region26: #{tpu_custom_call.1} parent=1 // pred_check
      _
    $region27: #{tpu_custom_call.1} parent=1 // pred_check_branch
      %28 = sbr.rel (0) target = $region29
    $region28: #{tpu_custom_call.1} parent=1 // pred_region
      _
    $region29: #{tpu_custom_call.1} parent=1 // pred_fallthru
      _
    %v29 = vld [vmem:[%s0] sm:$0xff]
    %v30 = vld [vmem:[%s0 + $0x8] sm:$0xff]
    %v31 = vld [vmem:[%s0 + $0x10] sm:$0xff]
    %v32 = vld [vmem:[%s0 + $0x18] sm:$0xff]
    %v33 = vld [vmem:[%s1] sm:$0xff]
    %v34 = vld [vmem:[%s1 + $0x8] sm:$0xff]
    %v35 = vld [vmem:[%s1 + $0x10] sm:$0xff]
    %v36 = vld [vmem:[%s1 + $0x18] sm:$0xff]
    %v37 = vld [vmem:[%s1 + $0x20] sm:$0xff]
    %v38 = vld [vmem:[%s1 + $0x28] sm:$0xff]
    %v39 = vld [vmem:[%s1 + $0x30] sm:$0xff]
    %v40 = vld [vmem:[%s1 + $0x38] sm:$0xff]
    %v41 = vld [vmem:[%s2] sm:$0xff]
    %v42 = vld [vmem:[%s2 + $0x8] sm:$0xff]
    %v43 = vld [vmem:[%s2 + $0x10] sm:$0xff]
    %v44 = vld [vmem:[%s2 + $0x18] sm:$0xff]
    %v45 = vld [vmem:[%s2 + $0x20] sm:$0xff]
    %v46 = vld [vmem:[%s2 + $0x28] sm:$0xff]
    %v47 = vld [vmem:[%s2 + $0x30] sm:$0xff]
    %v48 = vld [vmem:[%s2 + $0x38] sm:$0xff]
    %50 = vset.pattern.permute.xlu0 0
    %51 = vperm.xlu0 %50, %v41
    %v52 = vpop.permute.xlu0 %51
    %55 = vset.pattern.permute.xlu0 0
    %56 = vperm.xlu0 %55, %v42
    %v57 = vpop.permute.xlu0 %56
    %60 = vset.pattern.permute.xlu0 0
    %61 = vperm.xlu0 %60, %v43
    %v62 = vpop.permute.xlu0 %61
    %65 = vset.pattern.permute.xlu0 0
    %66 = vperm.xlu0 %65, %v44
    %v67 = vpop.permute.xlu0 %66
    %70 = vset.pattern.permute.xlu0 0
    %71 = vperm.xlu0 %70, %v45
    %v72 = vpop.permute.xlu0 %71
    %75 = vset.pattern.permute.xlu0 0
    %76 = vperm.xlu0 %75, %v46
    %v77 = vpop.permute.xlu0 %76
    %80 = vset.pattern.permute.xlu0 0
    %81 = vperm.xlu0 %80, %v47
    %v82 = vpop.permute.xlu0 %81
    %85 = vset.pattern.permute.xlu0 0
    %86 = vperm.xlu0 %85, %v48
    %v87 = vpop.permute.xlu0 %86
    %vm89 = vcmask 261120
    %v91 = vsel %vm89, %v33, 0
    %v94 = vsel %vm89, %v34, 0
    %v97 = vsel %vm89, %v35, 0
    %v100 = vsel %vm89, %v36, 0
    %v103 = vsel %vm89, %v37, 0
    %v106 = vsel %vm89, %v38, 0
    %v109 = vsel %vm89, %v39, 0
    %v112 = vsel %vm89, %v40, 0
    %114 = vmatpush.msra.mxu0 0.0
    %115 = vmatpush.msra.mxu0 0.0
    %116 = vmatpush.msra.mxu0 0.0
    %117 = vmatpush.msra.mxu0 0.0
    %118 = vmatpush.msra.mxu0 0.0
    %119 = vmatpush.msra.mxu0 0.0
    %120 = vmatpush.msra.mxu0 0.0
    %121 = vmatpush.msra.mxu0 0.0
    %122 = vmatpush.msra.mxu0 0.0
    %123 = vmatpush.msra.mxu0 0.0
    %124 = vmatpush.msra.mxu0 0.0
    %125 = vmatpush.msra.mxu0 0.0
    %126 = vmatpush.msra.mxu0 %v32
    %127 = vmatpush.msra.mxu0 %v31
    %128 = vmatpush.msra.mxu0 %v30
    %129 = vmatpush.msra.mxu0 %v29
    %130 = vmatmul.f32.gmra.mxu0 %v91
    %v131 = vpop.f32.mrf.mxu0
    %v132 = vadd.f32 %v52, %v131
    %133 = vmatmul.f32.gmra.mxu0 %v94
    %v134 = vpop.f32.mrf.mxu0
    %v135 = vadd.f32 %v57, %v134
    %136 = vmatmul.f32.gmra.mxu0 %v97
    %v137 = vpop.f32.mrf.mxu0
    %v138 = vadd.f32 %v62, %v137
    %139 = vmatmul.f32.gmra.mxu0 %v100
    %v140 = vpop.f32.mrf.mxu0
    %v141 = vadd.f32 %v67, %v140
    %142 = vmatmul.f32.gmra.mxu0 %v103
    %v143 = vpop.f32.mrf.mxu0
    %v144 = vadd.f32 %v72, %v143
    %145 = vmatmul.f32.gmra.mxu0 %v106
    %v146 = vpop.f32.mrf.mxu0
    %v147 = vadd.f32 %v77, %v146
    %148 = vmatmul.f32.gmra.mxu0 %v109
    %v149 = vpop.f32.mrf.mxu0
    %v150 = vadd.f32 %v82, %v149
    %151 = vmatmul.f32.gmra.mxu0 %v112
    %v152 = vpop.f32.mrf.mxu0
    %v153 = vadd.f32 %v87, %v152
    %154 = vdwg.mxu0
    %v155 = vmax.f32 %v132, 0.0
    %v156 = vmax.f32 %v135, 0.0
    %v157 = vmax.f32 %v138, 0.0
    %v158 = vmax.f32 %v141, 0.0
    %v159 = vmax.f32 %v144, 0.0
    %v160 = vmax.f32 %v147, 0.0
    %v161 = vmax.f32 %v150, 0.0
    %v162 = vmax.f32 %v153, 0.0
    %v163 = vld [vmem:[%s3] sm:$0xff]
    %v164 = vld [vmem:[%s3 + $0x8] sm:$0xff]
    %v165 = vld [vmem:[%s3 + $0x10] sm:$0xff]
    %v166 = vld [vmem:[%s3 + $0x18] sm:$0xff]
    %v167 = vld [vmem:[%s4] sm:$0xff]
    %v168 = vld [vmem:[%s4 + $0x8] sm:$0xff]
    %v169 = vld [vmem:[%s4 + $0x10] sm:$0xff]
    %v170 = vld [vmem:[%s4 + $0x18] sm:$0xff]
    %172 = vset.pattern.permute.xlu0 0
    %173 = vperm.xlu0 %172, %v167
    %v174 = vpop.permute.xlu0 %173
    %177 = vset.pattern.permute.xlu0 0
    %178 = vperm.xlu0 %177, %v168
    %v179 = vpop.permute.xlu0 %178
    %182 = vset.pattern.permute.xlu0 0
    %183 = vperm.xlu0 %182, %v169
    %v184 = vpop.permute.xlu0 %183
    %187 = vset.pattern.permute.xlu0 0
    %188 = vperm.xlu0 %187, %v170
    %v189 = vpop.permute.xlu0 %188
    %vm191 = vcmask 523264
    %v193 = vsel %vm191, %v163, 0
    %v196 = vsel %vm191, %v164, 0
    %v199 = vsel %vm191, %v165, 0
    %v202 = vsel %vm191, %v166, 0
    %204 = vmatpush.msra.mxu0 0.0
    %205 = vmatpush.msra.mxu0 0.0
    %206 = vmatpush.msra.mxu0 0.0
    %207 = vmatpush.msra.mxu0 0.0
    %208 = vmatpush.msra.mxu0 0.0
    %209 = vmatpush.msra.mxu0 0.0
    %210 = vmatpush.msra.mxu0 0.0
    %211 = vmatpush.msra.mxu0 0.0
    %212 = vmatpush.msra.mxu0 %v162
    %213 = vmatpush.msra.mxu0 %v161
    %214 = vmatpush.msra.mxu0 %v160
    %215 = vmatpush.msra.mxu0 %v159
    %216 = vmatpush.msra.mxu0 %v158
    %217 = vmatpush.msra.mxu0 %v157
    %218 = vmatpush.msra.mxu0 %v156
    %219 = vmatpush.msra.mxu0 %v155
    %220 = vmatmul.f32.gmra.mxu0 %v193
    %v221 = vpop.f32.mrf.mxu0
    %v222 = vadd.f32 %v174, %v221
    %223 = vmatmul.f32.gmra.mxu0 %v196
    %v224 = vpop.f32.mrf.mxu0
    %v225 = vadd.f32 %v179, %v224
    %226 = vmatmul.f32.gmra.mxu0 %v199
    %v227 = vpop.f32.mrf.mxu0
    %v228 = vadd.f32 %v184, %v227
    %229 = vmatmul.f32.gmra.mxu0 %v202
    %v230 = vpop.f32.mrf.mxu0
    %v231 = vadd.f32 %v189, %v230
    %232 = vdwg.mxu0
    %v233 = vmax.f32 %v222, 0.0
    %v234 = vmax.f32 %v225, 0.0
    %v235 = vmax.f32 %v228, 0.0
    %v236 = vmax.f32 %v231, 0.0
    %v237 = vld [vmem:[%s5] sm:$0x1]
    %v238 = vld [vmem:[#allocation2] sm:$0x1]
    %240 = vset.pattern.permute.xlu0 0
    %241 = vperm.xlu0 %240, %v238
    %v242 = vpop.permute.xlu0 %241
    %v244 = vperm.slane %v242, 0
    %v246 = vsel %vm89, %v237, 0
    %248 = vmatpush.msra.mxu0 0.0
    %249 = vmatpush.msra.mxu0 0.0
    %250 = vmatpush.msra.mxu0 0.0
    %251 = vmatpush.msra.mxu0 0.0
    %252 = vmatpush.msra.mxu0 0.0
    %253 = vmatpush.msra.mxu0 0.0
    %254 = vmatpush.msra.mxu0 0.0
    %255 = vmatpush.msra.mxu0 0.0
    %256 = vmatpush.msra.mxu0 0.0
    %257 = vmatpush.msra.mxu0 0.0
    %258 = vmatpush.msra.mxu0 0.0
    %259 = vmatpush.msra.mxu0 0.0
    %260 = vmatpush.msra.mxu0 %v236
    %261 = vmatpush.msra.mxu0 %v235
    %262 = vmatpush.msra.mxu0 %v234
    %263 = vmatpush.msra.mxu0 %v233
    %264 = vmatmul.f32.gmra.mxu0 %v246
    %v265 = vpop.f32.mrf.mxu0
    %v266 = vadd.f32 %v244, %v265
    %267 = vdwg.mxu0
    %v268 = vsub.f32 0.0, %v266
    %v269 = vmul.f32 %v268, 1.442695
    %v270 = vpow.pop %v269
    %v271 = vadd.f32 %v270, 1.0
    %v272 = vrcp.pop %v271
    %273 = vst [vmem:[#allocation3] sm:$0x1] %v272
    // Predicated region
    $region30: #{tpu_custom_call.1} parent=1 // pred_check
      _
    $region31: #{tpu_custom_call.1} parent=1 // pred_check_branch
      %275 = sbr.rel (0) target = $region33
    $region32: #{tpu_custom_call.1} parent=1 // pred_region
      %277 = vsyncadd [#allocation4], 0
      %s279 = sshll.u32 [#allocation3], 4
      %s280 = int_to_ptr.vmem [resolvable:$true] %s279
      %s281 = sshll.u32 %s7, 4
      %s282 = int_to_ptr.hbm [resolvable:$true] %s281
      %284 = dma.vmem_to_hbm [thread:$0]  %s280, 16, %s282, [#allocation4]
    $region33: #{tpu_custom_call.1} parent=1 // pred_fallthru
      _
    // Predicated region
    $region34: #{tpu_custom_call.1} parent=1 // pred_check
      _
    $region35: #{tpu_custom_call.1} parent=1 // pred_check_branch
      %286 = sbr.rel (0) target = $region37
    $region36: #{tpu_custom_call.1} parent=1 // pred_region
      %288 = dma.done [#allocation4], 16
    $region37: #{tpu_custom_call.1} parent=1 // pred_fallthru
      _
    %289 = vsyncpa [#allocation4], 1

</llo_original>
